<compile_context>
chip_gen: v7x
topology: tpu7x:2x2x1
jax: 0.10.0
libtpu: 0.0.40
codegen_flags: <defaults>
</compile_context>

<pallas_src>
import functools

import jax
import jax.numpy as jnp
from jax.experimental import pallas as pl
from jax.experimental.pallas import tpu as pltpu


def _pose_loss_kernel(da_ref, p_ref, out_ref, *, tb, mpad):
    # da_ref: (TB, 8, 8) augmented rotation/translation differences.
    # p_ref : (8, Mpad) homogeneous model points (row 3 = valid mask).
    lhs = da_ref[...].reshape(tb * 8, 8)          # contiguous merge, no lane crossing
    diff = jnp.dot(lhs, p_ref[...],
                   preferred_element_type=jnp.float32)   # (TB*8, Mpad)
    sq = diff * diff
    # Fold the TB axis (sublane-tile batches) with VPU adds only; the lane
    # dimension (Mpad) is preserved so the output store stays lane-dense.
    out_ref[...] = jnp.sum(sq.reshape(tb, 8, mpad), axis=0)   # (8, Mpad)


def pose_loss(R1, t1, R2, t2, model_points):
    """R1, R2: (B, 3, 3); t1, t2: (B, 3); model_points: (M, 3). Returns scalar."""
    f32 = jnp.float32
    B = R1.shape[0]
    M = model_points.shape[0]
    Mpad = max(128, ((M + 127) // 128) * 128)

    # ---- choose pose-batch tile TB (multiple of 8, VMEM-budgeted) ----------
    TB = 128
    while TB > 8 and TB * 8 * Mpad * 4 > (4 << 20):   # keep matmul result <= ~4 MiB
        TB //= 2
    if B <= TB:
        TB = max(8, -(-B // 8) * 8)                   # don't over-pad tiny batches
    Bpad = -(-B // TB) * TB
    num_chunks = Bpad // TB

    # ---- wrapper-side packing (fuses with the unavoidable pad scatter) -----
    dR = (R1 - R2).astype(f32)                        # (B, 3, 3)
    dt = (t1 - t2).astype(f32)                        # (B, 3)

    # Augmented difference transform, zero-padded: rows/cols >= 4 are zero,
    # column 3 holds dt (homogeneous translation).
    dA = jnp.zeros((Bpad, 8, 8), f32)
    dA = dA.at[:B, :3, :3].set(dR)
    dA = dA.at[:B, :3, 3].set(dt)

    # Homogeneous model points, transposed to (8, Mpad):
    #   rows 0..2 = xyz, row 3 = 1.0 for valid points (doubles as pad mask).
    Ph = jnp.zeros((8, Mpad), f32)
    Ph = Ph.at[:3, :M].set(model_points.astype(f32).T)
    Ph = Ph.at[3, :M].set(1.0)

    kernel = functools.partial(_pose_loss_kernel, tb=TB, mpad=Mpad)

    partials = pl.pallas_call(
        kernel,
        out_shape=jax.ShapeDtypeStruct((num_chunks, 8, Mpad), f32),
        grid_spec=pltpu.PrefetchScalarGridSpec(
            num_scalar_prefetch=0,
            grid=(num_chunks,),
            in_specs=[
                pl.BlockSpec((TB, 8, 8), lambda c: (c, 0, 0)),    # dA (varying)
                pl.BlockSpec((8, Mpad), lambda c: (0, 0)),        # Ph (resident)
            ],
            out_specs=pl.BlockSpec((None, 8, Mpad), lambda c: (c, 0, 0)),
        ),
        compiler_params=pltpu.CompilerParams(
            dimension_semantics=("parallel",)),
    )(dA, Ph)

    # Padded batch rows and padded point columns contribute exactly zero.
    scale = 0.5 / float(B * M * 3)
    return jnp.sum(partials) * jnp.float32(scale)


def _reference(R1, t1, R2, t2, model_points):
    m1 = jnp.einsum('...jk,mk->...mj', R1, model_points) + t1[:, None, :]
    m2 = jnp.einsum('...jk,mk->...mj', R2, model_points) + t2[:, None, :]
    return 0.5 * jnp.mean((m1 - m2) ** 2)


if __name__ == "__main__":
    key = jax.random.PRNGKey(0)
    kR1, kR2, kt1, kt2, kP = jax.random.split(key, 5)

    B = 2          # batch
    M = 100        # number of object points (padded to 128 inside the wrapper)

    # Deterministic "object points" (stand-in for the nn.Parameter buffer).
    model_points = jax.random.normal(kP, (M, 3), dtype=jnp.float32)

    # Random rotation-like matrices + translations (loss needs no orthonormality).
    R1 = jax.random.normal(kR1, (B, 3, 3), dtype=jnp.float32)
    R2 = jax.random.normal(kR2, (B, 3, 3), dtype=jnp.float32)
    t1 = jax.random.normal(kt1, (B, 3), dtype=jnp.float32)
    t2 = jax.random.normal(kt2, (B, 3), dtype=jnp.float32)

    loss = jax.block_until_ready(pose_loss(R1, t1, R2, t2, model_points))
    ref = jax.block_until_ready(_reference(R1, t1, R2, t2, model_points))
    assert jnp.allclose(loss, ref, rtol=1e-5, atol=1e-5), (loss, ref)

    print("KERNEL_OK")
</pallas_src>

<mosaic_0001>
module attributes {stable_mosaic.version = 11 : i64} {
  func.func @_pose_loss_kernel(%arg0: i32, %arg1: memref<8x8x8xf32, #tpu.memory_space<vmem>>, %arg2: memref<8x128xf32, #tpu.memory_space<vmem>>, %arg3: memref<1x8x128xf32, #tpu.memory_space<vmem>>) attributes {dimension_semantics = [#tpu.dimension_semantics<parallel>], iteration_bounds = array<i64: 1>, scalar_prefetch = 0 : i64, scratch_operands = 0 : i64, tpu.core_type = #tpu.core_type<tc>, window_params = [{transform_indices = @transform_0, window_bounds = array<i64: 8, 8, 8>}, {pipeline_mode = #tpu.pipeline_mode<synchronous>, transform_indices = @transform_1, window_bounds = array<i64: 8, 128>}, {transform_indices = @transform_2, window_bounds = array<i64: 1, 8, 128>}]} {
    %c0 = arith.constant 0 : index
    %c0_0 = arith.constant 0 : index
    %c0_1 = arith.constant 0 : index
    %0 = vector.load %arg1[%c0, %c0_0, %c0_1] : memref<8x8x8xf32, #tpu.memory_space<vmem>>, vector<8x8x8xf32>
    %1 = vector.shape_cast %0 : vector<8x8x8xf32> to vector<64x8xf32>
    %c0_2 = arith.constant 0 : index
    %c0_3 = arith.constant 0 : index
    %2 = vector.load %arg2[%c0_2, %c0_3] : memref<8x128xf32, #tpu.memory_space<vmem>>, vector<8x128xf32>
    %cst = arith.constant dense<0.000000e+00> : vector<64x128xf32>
    %3 = tpu.matmul %1, %2, %cst {dimension_numbers = #tpu.dot_dimension_numbers<[1], [0], [0], [1], [0, 0, 1, 1], [], []>} : vector<64x8xf32>, vector<8x128xf32>, vector<64x128xf32> -> vector<64x128xf32>
    %4 = arith.mulf %3, %3 : vector<64x128xf32>
    %5 = vector.shape_cast %4 : vector<64x128xf32> to vector<8x8x128xf32>
    %cst_4 = arith.constant dense<0.000000e+00> : vector<8x128xf32>
    %6 = vector.multi_reduction <add>, %5, %cst_4 [0] : vector<8x8x128xf32> to vector<8x128xf32>
    %c0_5 = arith.constant 0 : index
    %c0_6 = arith.constant 0 : index
    %c0_7 = arith.constant 0 : index
    %7 = vector.load %arg3[%c0_5, %c0_6, %c0_7] : memref<1x8x128xf32, #tpu.memory_space<vmem>>, vector<1x8x128xf32>
    %8 = vector.shape_cast %7 : vector<1x8x128xf32> to vector<8x128xf32>
    %9 = vector.shape_cast %6 : vector<8x128xf32> to vector<1x8x128xf32>
    tpu.vector_store %arg3[%c0_5, %c0_6, %c0_7], %9 {strides = array<i32>} : memref<1x8x128xf32, #tpu.memory_space<vmem>>, vector<1x8x128xf32>,
    return
  }
  func.func @transform_0(%arg0: i32) -> (i32, i32, i32) {
    %c0_i32 = arith.constant 0 : i32
    %c0_i32_0 = arith.constant 0 : i32
    %c0_i32_1 = arith.constant 0 : i32
    return %arg0, %c0_i32, %c0_i32_0 : i32, i32, i32
  }
  func.func @transform_1(%arg0: i32) -> (i32, i32) {
    %c0_i32 = arith.constant 0 : i32
    %c0_i32_0 = arith.constant 0 : i32
    %c0_i32_1 = arith.constant 0 : i32
    return %c0_i32, %c0_i32_0 : i32, i32
  }
  func.func @transform_2(%arg0: i32) -> (i32, i32, i32) {
    %c0_i32 = arith.constant 0 : i32
    %c0_i32_0 = arith.constant 0 : i32
    %c0_i32_1 = arith.constant 0 : i32
    return %arg0, %c0_i32, %c0_i32_0 : i32, i32, i32
  }
}

</mosaic_0001>

<llo_original>
// kernel: tpu_custom_call.1
$region0: #{tpu_custom_call.1}
  #allocation0 [shape = 'u32[]', space=smem, size = 0x4, offset = 0x4, fixed_abs, tag = 'smem constant byte address 0x4 - core index']
  #allocation1 [shape = 'u32[144,128]{1,0:T(1,128)}', space=vmem, size = 0x12000, scoped, tag = 'internal scratch']
  %s0 = inlined_call_operand.hbm [shape: f32[8,8,8], index: 0, kind: input, shape index: {}]
  %s1 = inlined_call_operand.hbm [shape: f32[8,128], index: 1, kind: input, shape index: {}]
  %s2 = inlined_call_operand.hbm [shape: f32[1,8,128], index: 2, kind: output, shape index: {}]
  %s3 = sld [smem:[#allocation0]]
  $region26: #{tpu_custom_call.1} parent=0
    _
  %s5 = ssub.s32 1, %s3
  %s6 = scalar_select 0, %s5, %s3
  $region1: #{tpu_custom_call.1} parent=0
    #allocation2 [shape = 'u8[32768]{0}', space=vmem, size = 0x8000, scoped, tag = 'input window, operand 0, single buffered']
    #allocation3 [shape = 's32[1]{0}', space=sflag, size = 0x4, scoped, tag = 'scoped memory for tpu_custom_call.1']
    #allocation4 [shape = 's32[1]{0}', space=sflag, size = 0x4, scoped, tag = 'scoped memory for tpu_custom_call.1']
    #allocation5 [shape = 'u8[4096]{0}', space=vmem, size = 0x1000, scoped, tag = 'input window, operand 1, single buffered']
    #allocation6 [shape = 's32[1]{0}', space=sflag, size = 0x4, scoped, tag = 'scoped memory for tpu_custom_call.1']
    #allocation7 [shape = 'u8[4096]{0}', space=vmem, size = 0x1000, scoped, tag = 'output window, operand 0, single buffered']
    %7 = vsyncpa [#allocation3], 0
    %8 = vsyncpa [#allocation6], 0
    %9 = vsyncpa [#allocation4], 0
    // Predicated region
    $region2: #{tpu_custom_call.1} parent=1 // pred_check
      _
    $region3: #{tpu_custom_call.1} parent=1 // pred_check_branch
      %11 = sbr.rel (0) target = $region5
    $region4: #{tpu_custom_call.1} parent=1 // pred_region
      %s13 = ssub.s32 1024, 1024
      %14 = vsyncadd [#allocation3], %s13
      %s15 = sshll.u32 [#allocation2], 4
      %s16 = int_to_ptr.vmem [resolvable:$true] %s15
      %21 = dma.hbm_to_vmem [thread:$0]  %s0, 1024, %s16, [#allocation3], 128, 128, 8
    $region5: #{tpu_custom_call.1} parent=1 // pred_fallthru
      _
    // Predicated region
    $region6: #{tpu_custom_call.1} parent=1 // pred_check
      _
    $region7: #{tpu_custom_call.1} parent=1 // pred_check_branch
      %23 = sbr.rel (0) target = $region9
    $region8: #{tpu_custom_call.1} parent=1 // pred_region
      %s25 = ssub.s32 128, 128
      %26 = vsyncadd [#allocation6], %s25
      %s28 = sshll.u32 [#allocation5], 4
      %s29 = int_to_ptr.vmem [resolvable:$true] %s28
      %31 = dma.hbm_to_vmem [thread:$0]  %s1, 128, %s29, [#allocation6]
    $region9: #{tpu_custom_call.1} parent=1 // pred_fallthru
      _
    // Predicated region
    $region10: #{tpu_custom_call.1} parent=1 // pred_check
      _
    $region11: #{tpu_custom_call.1} parent=1 // pred_check_branch
      %33 = sbr.rel (0) target = $region13
    $region12: #{tpu_custom_call.1} parent=1 // pred_region
      %34 = dma.done [#allocation3], 1024
    $region13: #{tpu_custom_call.1} parent=1 // pred_fallthru
      _
    // Predicated region
    $region14: #{tpu_custom_call.1} parent=1 // pred_check
      _
    $region15: #{tpu_custom_call.1} parent=1 // pred_check_branch
      %36 = sbr.rel (0) target = $region17
    $region16: #{tpu_custom_call.1} parent=1 // pred_region
      %37 = dma.done [#allocation6], 128
    $region17: #{tpu_custom_call.1} parent=1 // pred_fallthru
      _
    %v38 = vld [vmem:[#allocation2] sm:$0xff]
    %v39 = vld [vmem:[#allocation2 + $0x8] sm:$0xff]
    %v40 = vld [vmem:[#allocation2 + $0x10] sm:$0xff]
    %v41 = vld [vmem:[#allocation2 + $0x18] sm:$0xff]
    %v42 = vld [vmem:[#allocation2 + $0x20] sm:$0xff]
    %v43 = vld [vmem:[#allocation2 + $0x28] sm:$0xff]
    %v44 = vld [vmem:[#allocation2 + $0x30] sm:$0xff]
    %v45 = vld [vmem:[#allocation2 + $0x38] sm:$0xff]
    %v46 = vld [vmem:[#allocation5] sm:$0xff]
    %vm47 = vcmask 64512
    %v49 = vsel %vm47, %v38, 0
    %v52 = vsel %vm47, %v39, 0
    %v55 = vsel %vm47, %v40, 0
    %v58 = vsel %vm47, %v41, 0
    %v61 = vsel %vm47, %v42, 0
    %v64 = vsel %vm47, %v43, 0
    %v67 = vsel %vm47, %v44, 0
    %v70 = vsel %vm47, %v45, 0
    %72 = vmatprep.subr.mxu0 0.0
    %73 = vmatpush1.msra.mxu0 %v46
    %74 = vmatprep.subr.mxu0 0.0
    %75 = vmatpush1.msra.mxu0 0.0
    %76 = vmatprep.subr.mxu0 0.0
    %77 = vmatpush1.msra.mxu0 0.0
    %78 = vmatprep.subr.mxu0 0.0
    %79 = vmatpush1.msra.mxu0 0.0
    %80 = vmatprep.subr.mxu0 0.0
    %81 = vmatpush1.msra.mxu0 0.0
    %82 = vmatprep.subr.mxu0 0.0
    %83 = vmatpush1.msra.mxu0 0.0
    %84 = vmatprep.subr.mxu0 0.0
    %85 = vmatpush1.msra.mxu0 0.0
    %86 = vmatprep.subr.mxu0 0.0
    %87 = vmatpush1.msra.mxu0 0.0
    %88 = vmatprep.subr.mxu0 0.0
    %89 = vmatpush1.msra.mxu0 0.0
    %90 = vmatprep.subr.mxu0 0.0
    %91 = vmatpush1.msra.mxu0 0.0
    %92 = vmatprep.subr.mxu0 0.0
    %93 = vmatpush1.msra.mxu0 0.0
    %94 = vmatprep.subr.mxu0 0.0
    %95 = vmatpush1.msra.mxu0 0.0
    %96 = vmatprep.subr.mxu0 0.0
    %97 = vmatpush1.msra.mxu0 0.0
    %98 = vmatprep.subr.mxu0 0.0
    %99 = vmatpush1.msra.mxu0 0.0
    %100 = vmatprep.subr.mxu0 0.0
    %101 = vmatpush1.msra.mxu0 0.0
    %102 = vmatprep.subr.mxu0 0.0
    %103 = vmatpush1.msra.mxu0 0.0
    %104 = vmatprep.subr.mxu0 0.0
    %105 = vmatpush1.msra.mxu0 0.0
    %106 = vmatprep.subr.mxu0 0.0
    %107 = vmatpush1.msra.mxu0 0.0
    %108 = vmatprep.subr.mxu0 0.0
    %109 = vmatpush1.msra.mxu0 0.0
    %110 = vmatprep.subr.mxu0 0.0
    %111 = vmatpush1.msra.mxu0 0.0
    %112 = vmatprep.subr.mxu0 0.0
    %113 = vmatpush1.msra.mxu0 0.0
    %114 = vmatprep.subr.mxu0 0.0
    %115 = vmatpush1.msra.mxu0 0.0
    %116 = vmatprep.subr.mxu0 0.0
    %117 = vmatpush1.msra.mxu0 0.0
    %118 = vmatprep.subr.mxu0 0.0
    %119 = vmatpush1.msra.mxu0 0.0
    %120 = vmatprep.subr.mxu0 0.0
    %121 = vmatpush1.msra.mxu0 0.0
    %122 = vmatprep.subr.mxu0 0.0
    %123 = vmatpush1.msra.mxu0 0.0
    %124 = vmatprep.subr.mxu0 0.0
    %125 = vmatpush1.msra.mxu0 0.0
    %126 = vmatprep.subr.mxu0 0.0
    %127 = vmatpush1.msra.mxu0 0.0
    %128 = vmatprep.subr.mxu0 0.0
    %129 = vmatpush1.msra.mxu0 0.0
    %130 = vmatprep.subr.mxu0 0.0
    %131 = vmatpush1.msra.mxu0 0.0
    %132 = vmatprep.subr.mxu0 0.0
    %133 = vmatpush1.msra.mxu0 0.0
    %134 = vmatprep.subr.mxu0 0.0
    %135 = vmatpush1.msra.mxu0 0.0
    %136 = vmatprep.mubr.f32.mxu0 0.0
    %137 = vmatmul.mubr.f32.gmra.mrb[0].mxu0 %v49
    %v138 = vpop.f32.mrb[0].mxu0
    %v139 = vadd.f32 0.0, %v138
    %v140 = vpop.f32.mrb[0].mxu0
    %141 = vmatprep.mubr.f32.mxu0 0.0
    %142 = vmatmul.mubr.f32.gmra.mrb[0].mxu0 %v52
    %v143 = vpop.f32.mrb[0].mxu0
    %v144 = vadd.f32 0.0, %v143
    %v145 = vpop.f32.mrb[0].mxu0
    %146 = vmatprep.mubr.f32.mxu0 0.0
    %147 = vmatmul.mubr.f32.gmra.mrb[0].mxu0 %v55
    %v148 = vpop.f32.mrb[0].mxu0
    %v149 = vadd.f32 0.0, %v148
    %v150 = vpop.f32.mrb[0].mxu0
    %151 = vmatprep.mubr.f32.mxu0 0.0
    %152 = vmatmul.mubr.f32.gmra.mrb[0].mxu0 %v58
    %v153 = vpop.f32.mrb[0].mxu0
    %v154 = vadd.f32 0.0, %v153
    %v155 = vpop.f32.mrb[0].mxu0
    %156 = vmatprep.mubr.f32.mxu0 0.0
    %157 = vmatmul.mubr.f32.gmra.mrb[0].mxu0 %v61
    %v158 = vpop.f32.mrb[0].mxu0
    %v159 = vadd.f32 0.0, %v158
    %v160 = vpop.f32.mrb[0].mxu0
    %161 = vmatprep.mubr.f32.mxu0 0.0
    %162 = vmatmul.mubr.f32.gmra.mrb[0].mxu0 %v64
    %v163 = vpop.f32.mrb[0].mxu0
    %v164 = vadd.f32 0.0, %v163
    %v165 = vpop.f32.mrb[0].mxu0
    %166 = vmatprep.mubr.f32.mxu0 0.0
    %167 = vmatmul.mubr.f32.gmra.mrb[0].mxu0 %v67
    %v168 = vpop.f32.mrb[0].mxu0
    %v169 = vadd.f32 0.0, %v168
    %v170 = vpop.f32.mrb[0].mxu0
    %171 = vmatprep.mubr.f32.mxu0 0.0
    %172 = vmatmul.mubr.f32.gmra.mrb[0].mxu0 %v70
    %v173 = vpop.f32.mrb[0].mxu0
    %v174 = vadd.f32 0.0, %v173
    %v175 = vpop.f32.mrb[0].mxu0
    %176 = vdwg.mxu0
    %v177 = vmul.f32 %v139, %v139
    %v178 = vmul.f32 %v144, %v144
    %v179 = vmul.f32 %v149, %v149
    %v180 = vmul.f32 %v154, %v154
    %v181 = vmul.f32 %v159, %v159
    %v182 = vmul.f32 %v164, %v164
    %v183 = vmul.f32 %v169, %v169
    %v184 = vmul.f32 %v174, %v174
    %v185 = vadd.f32 %v177, %v178
    %v186 = vadd.f32 %v185, %v179
    %v187 = vadd.f32 %v186, %v180
    %v188 = vadd.f32 %v187, %v181
    %v189 = vadd.f32 %v188, %v182
    %v190 = vadd.f32 %v189, %v183
    %v191 = vadd.f32 %v190, %v184
    %192 = vst [vmem:[#allocation7] sm:$0xff] %v191
    // Predicated region
    $region18: #{tpu_custom_call.1} parent=1 // pred_check
      _
    $region19: #{tpu_custom_call.1} parent=1 // pred_check_branch
      %194 = sbr.rel (0) target = $region21
    $region20: #{tpu_custom_call.1} parent=1 // pred_region
      %s196 = ssub.s32 128, 128
      %197 = vsyncadd [#allocation4], %s196
      %s199 = sshll.u32 [#allocation7], 4
      %s200 = int_to_ptr.vmem [resolvable:$true] %s199
      %202 = dma.vmem_to_hbm [thread:$0]  %s200, 128, %s2, [#allocation4]
    $region21: #{tpu_custom_call.1} parent=1 // pred_fallthru
      _
    // Predicated region
    $region22: #{tpu_custom_call.1} parent=1 // pred_check
      _
    $region23: #{tpu_custom_call.1} parent=1 // pred_check_branch
      %204 = sbr.rel (0) target = $region25
    $region24: #{tpu_custom_call.1} parent=1 // pred_region
      %205 = dma.done [#allocation4], 128
    $region25: #{tpu_custom_call.1} parent=1 // pred_fallthru
      _
    %206 = vsyncpa [#allocation3], 1
    %207 = vsyncpa [#allocation6], 1
    %208 = vsyncpa [#allocation4], 1

</llo_original>
